<compile_context>
chip_gen: v7x
topology: tpu7x:2x2x1
jax: 0.10.0
libtpu: 0.0.40
codegen_flags: <defaults>
</compile_context>

<pallas_src>
import functools
import math

import jax
import jax.numpy as jnp
from jax.experimental import pallas as pl
from jax.experimental.pallas import tpu as pltpu


def _pe_select_kernel(x_ref, expand_ref, o_ref, *, padding_idx):
    """Per row tile: out[n, l*D+d] = mask[n,l]*delta[l,d] + MLP(0)[d], one matmul."""
    mask = (x_ref[...] != padding_idx).astype(jnp.float32)            # (tn, L_aug)
    o_ref[...] = jnp.dot(
        mask, expand_ref[...],
        precision=jax.lax.Precision.HIGHEST,
        preferred_element_type=jnp.float32,
    ).astype(o_ref.dtype)                                              # (tn, L*D)


def _sinusoidal_table(L, D):
    """Standard sinusoidal PE table (L, D): even dims sin, odd dims cos."""
    pos = jnp.arange(L, dtype=jnp.float32)[:, None]                    # (L, 1)
    k = jnp.arange(D)
    freq = jnp.exp(-(k - (k % 2)).astype(jnp.float32) * (math.log(10000.0) / D))
    angle = pos * freq[None, :]
    return jnp.where((k % 2) == 0, jnp.sin(angle), jnp.cos(angle)).astype(jnp.float32)


def _build_expand(L, D, w1, b1, w2, b2):
    """Grid-invariant (L_aug, L*D) matrix with mask_aug @ expand == MLP(mask*pe)."""
    hi = jax.lax.Precision.HIGHEST
    pe = _sinusoidal_table(L, D)                                       # (L, D)

    # 2-layer MLP on the row-invariant table (tiny, runs once at trace time).
    h = jnp.maximum(jnp.dot(pe, w1, precision=hi) + b1, 0.0)
    y_tab = jnp.dot(h, w2, precision=hi) + b2                          # (L, D)

    # MLP(0): value at padded positions (mask zeroes the PE before the MLP).
    h0 = jnp.maximum(b1, 0.0)                                          # (1, 2D)
    y_pad = jnp.dot(h0, w2, precision=hi) + b2                         # (1, D)

    delta = y_tab - y_pad                                              # (L, D)

    # Block-diagonal scatter: core[k, l*D + d] = delta[k, d] iff l == k else 0.
    eye = jnp.eye(L, dtype=jnp.float32)
    core = jnp.einsum('lk,ld->kld', eye, delta).reshape(L, L * D)      # (L, L*D)
    # Bias row selected by the always-on "bias" token column: y_pad tiled per pos.
    bias_row = jnp.tile(y_pad, (1, L))                                 # (1, L*D)

    L_aug = ((L + 1 + 7) // 8) * 8        # pad contraction dim to sublane multiple
    pad_rows = jnp.zeros((L_aug - L - 1, L * D), jnp.float32)
    expand = jnp.concatenate([core, bias_row, pad_rows], axis=0)       # (L_aug, L*D)
    return expand, L_aug


def positional_embedding(x, w1, b1, w2, b2, *, padding_idx, emb_dim,
                         out_dtype=jnp.float32):
    """x: (B, nrows, ncols) int tokens -> (B, nrows, ncols, emb_dim)."""
    B, R, L = x.shape
    D = emb_dim
    N = B * R
    LD = L * D

    expand, L_aug = _build_expand(L, D, w1, b1, w2, b2)

    # Augment tokens: column L is an always-non-pad "bias" token (selects the
    # MLP(0) row of `expand`); extra alignment columns are pad tokens (select
    # the zero rows, contribute nothing).
    x2 = x.reshape(N, L).astype(jnp.int32)
    bias_col = jnp.full((N, 1), padding_idx + 1, dtype=jnp.int32)
    x2 = jnp.concatenate([x2, bias_col], axis=1)                       # (N, L+1)

    # ---- Row-tile size from an explicit, generation-safe VMEM budget --------
    out_row_bytes = LD * jnp.dtype(out_dtype).itemsize
    tok_row_bytes = L_aug * 4
    expand_bytes = 2 * L_aug * LD * 4          # counted as double-buffered
    vmem_budget = 32 * 1024 * 1024             # fits v5e/v6e (128 MiB) & v7x (64 MiB)
    avail = max(vmem_budget - expand_bytes,
                2 * 8 * (out_row_bytes + tok_row_bytes))
    tn = avail // (2 * (out_row_bytes + tok_row_bytes))
    tn = max(8, (tn // 8) * 8)
    # Guarantee >= ~4 grid steps (when N allows) so the "parallel" axis shards
    # across v7x's two TensorCores and output writeback overlaps compute.
    target_steps = 4
    tn_steps = max(8, ((pl.cdiv(N, target_steps) + 7) // 8) * 8)
    tn = min(tn, tn_steps)

    n_pad = pl.cdiv(N, tn) * tn
    x2 = jnp.pad(x2, ((0, n_pad - N), (0, L_aug - (L + 1))),
                 constant_values=padding_idx)                          # (n_pad, L_aug)

    kernel = functools.partial(_pe_select_kernel, padding_idx=padding_idx)

    out = pl.pallas_call(
        kernel,
        out_shape=jax.ShapeDtypeStruct((n_pad, LD), out_dtype),
        grid_spec=pltpu.PrefetchScalarGridSpec(
            num_scalar_prefetch=0,
            grid=(n_pad // tn,),
            in_specs=[
                pl.BlockSpec((tn, L_aug), lambda i: (i, 0)),           # tokens
                pl.BlockSpec((L_aug, LD), lambda i: (0, 0)),           # expand (resident)
            ],
            out_specs=pl.BlockSpec((tn, LD), lambda i: (i, 0)),        # lane-dense
        ),
        compiler_params=pltpu.CompilerParams(
            dimension_semantics=("parallel",),
            vmem_limit_bytes=48 * 1024 * 1024),
    )(x2, expand)

    return out[:N].reshape(B, R, L, D)


def _reference(x, w1, b1, w2, b2, padding_idx, D):
    """Pure-JAX mirror of the PyTorch module (eval mode)."""
    B, R, L = x.shape
    mask = (x.reshape(-1, L) != padding_idx)
    pe = _sinusoidal_table(L, D)
    pe = mask[:, :, None].astype(jnp.float32) * pe[None]              # (N, L, D)
    hi = jax.lax.Precision.HIGHEST
    h = jnp.maximum(jnp.einsum('nld,dh->nlh', pe, w1, precision=hi) + b1, 0.0)
    out = jnp.einsum('nlh,hd->nld', h, w2, precision=hi) + b2
    return out.reshape(B, R, L, D)


if __name__ == "__main__":
    # Small shapes consistent with the module's forward (N=16 rows -> 2 grid steps).
    B, R, L = 2, 8, 16          # batch, nrows, ncols
    emb_dim = 32
    padding_idx = 0

    key = jax.random.PRNGKey(0)
    k_x, k_w1, k_b1, k_w2, k_b2 = jax.random.split(key, 5)

    # integer tokens in [0, 8); 0 is the padding token -> nontrivial mask
    x = jax.random.randint(k_x, (B, R, L), 0, 8, dtype=jnp.int32)

    # deterministic MLP params (stored pre-transposed for x @ W + b)
    w1 = jax.random.normal(k_w1, (emb_dim, 2 * emb_dim), jnp.float32) * 0.05
    b1 = jax.random.normal(k_b1, (1, 2 * emb_dim), jnp.float32) * 0.01
    w2 = jax.random.normal(k_w2, (2 * emb_dim, emb_dim), jnp.float32) * 0.05
    b2 = jax.random.normal(k_b2, (1, emb_dim), jnp.float32) * 0.01

    out = positional_embedding(x, w1, b1, w2, b2,
                               padding_idx=padding_idx, emb_dim=emb_dim)
    out = jax.block_until_ready(out)

    assert out.shape == (B, R, L, emb_dim), out.shape
    assert out.dtype == jnp.float32

    ref = _reference(x, w1, b1, w2, b2, padding_idx, emb_dim)
    err = float(jnp.max(jnp.abs(out - ref)))
    assert err < 1e-3, f"max abs err {err}"
    print("KERNEL_OK")
</pallas_src>

<mosaic_0001>
module attributes {stable_mosaic.version = 11 : i64} {
  func.func @_pe_select_kernel(%arg0: i32, %arg1: memref<8x24xi32, #tpu.memory_space<vmem>>, %arg2: memref<24x512xf32, #tpu.memory_space<vmem>>, %arg3: memref<8x512xf32, #tpu.memory_space<vmem>>) attributes {dimension_semantics = [#tpu.dimension_semantics<parallel>], iteration_bounds = array<i64: 2>, scalar_prefetch = 0 : i64, scratch_operands = 0 : i64, tpu.core_type = #tpu.core_type<tc>, window_params = [{transform_indices = @transform_0, window_bounds = array<i64: 8, 24>}, {pipeline_mode = #tpu.pipeline_mode<synchronous>, transform_indices = @transform_1, window_bounds = array<i64: 24, 512>}, {transform_indices = @transform_2, window_bounds = array<i64: 8, 512>}]} {
    %c0 = arith.constant 0 : index
    %c0_0 = arith.constant 0 : index
    %0 = vector.load %arg1[%c0, %c0_0] : memref<8x24xi32, #tpu.memory_space<vmem>>, vector<8x24xi32>
    %c0_i32 = arith.constant 0 : i32
    %1 = vector.broadcast %c0_i32 : i32 to vector<8x24xi32>
    %2 = arith.cmpi ne, %0, %1 : vector<8x24xi32>
    %3 = arith.extui %2 : vector<8x24xi1> to vector<8x24xi32>
    %4 = arith.sitofp %3 : vector<8x24xi32> to vector<8x24xf32>
    %c0_1 = arith.constant 0 : index
    %c0_2 = arith.constant 0 : index
    %5 = vector.load %arg2[%c0_1, %c0_2] : memref<24x512xf32, #tpu.memory_space<vmem>>, vector<24x512xf32>
    %cst = arith.constant dense<0.000000e+00> : vector<8x512xf32>
    %6 = tpu.matmul %4, %5, %cst {dimension_numbers = #tpu.dot_dimension_numbers<[1], [0], [0], [1], [0, 0, 1, 1], [], []>, precision = #tpu.contract_precision<fp32>} : vector<8x24xf32>, vector<24x512xf32>, vector<8x512xf32> -> vector<8x512xf32>
    %c0_3 = arith.constant 0 : index
    %c0_4 = arith.constant 0 : index
    %7 = vector.load %arg3[%c0_3, %c0_4] : memref<8x512xf32, #tpu.memory_space<vmem>>, vector<8x512xf32>
    tpu.vector_store %arg3[%c0_3, %c0_4], %6 {strides = array<i32>} : memref<8x512xf32, #tpu.memory_space<vmem>>, vector<8x512xf32>,
    return
  }
  func.func @transform_0(%arg0: i32) -> (i32, i32) {
    %c0_i32 = arith.constant 0 : i32
    %c0_i32_0 = arith.constant 0 : i32
    return %arg0, %c0_i32 : i32, i32
  }
  func.func @transform_1(%arg0: i32) -> (i32, i32) {
    %c0_i32 = arith.constant 0 : i32
    %c0_i32_0 = arith.constant 0 : i32
    %c0_i32_1 = arith.constant 0 : i32
    return %c0_i32, %c0_i32_0 : i32, i32
  }
  func.func @transform_2(%arg0: i32) -> (i32, i32) {
    %c0_i32 = arith.constant 0 : i32
    %c0_i32_0 = arith.constant 0 : i32
    return %arg0, %c0_i32 : i32, i32
  }
}

</mosaic_0001>

<llo_original>
// kernel: tpu_custom_call.1
$region0: #{tpu_custom_call.1}
  #allocation0 [shape = 'u32[]', space=smem, size = 0x4, offset = 0x4, fixed_abs, tag = 'smem constant byte address 0x4 - core index']
  #allocation1 [shape = 'u32[144,128]{1,0:T(1,128)}', space=vmem, size = 0x12000, scoped, tag = 'internal scratch']
  %s0 = inlined_call_operand.hbm [shape: s32[16,24], index: 0, kind: input, shape index: {}]
  %s1 = inlined_call_operand.hbm [shape: f32[24,512], index: 1, kind: input, shape index: {}]
  %s2 = inlined_call_operand.hbm [shape: f32[16,512], index: 2, kind: output, shape index: {}]
  %s3 = sld [smem:[#allocation0]]
  $region49: #{tpu_custom_call.1} parent=0
    _
  %s5 = ssub.s32 1, %s3
  %s6 = scalar_select 0, %s5, %s3
  $region1: #{tpu_custom_call.1} parent=0
    #allocation2 [shape = 'u8[8192]{0}', space=vmem, size = 0x2000, scoped, tag = 'input window, operand 0']
    #allocation3 [shape = 's32[2]{0}', space=sflag, size = 0x8, scoped, tag = 'scoped memory for tpu_custom_call.1']
    #allocation4 [shape = 's32[2]{0}', space=sflag, size = 0x8, scoped, tag = 'scoped memory for tpu_custom_call.1']
    #allocation5 [shape = 'u8[49152]{0}', space=vmem, size = 0xc000, scoped, tag = 'input window, operand 1, single buffered']
    #allocation6 [shape = 's32[1]{0}', space=sflag, size = 0x4, scoped, tag = 'scoped memory for tpu_custom_call.1']
    #allocation7 [shape = 'u8[32768]{0}', space=vmem, size = 0x8000, scoped, tag = 'output window, operand 0']
    %7 = vsyncpa [#allocation3], 0
    %s8 = scalar_lea.sflag [#allocation3], 1
    %9 = vsyncpa %s8, 0
    %10 = vsyncpa [#allocation6], 0
    %11 = vsyncpa [#allocation4], 0
    %s12 = scalar_lea.sflag [#allocation4], 1
    %13 = vsyncpa %s12, 0
    loop: start=0, step=1, limit=4
    $region2: #{tpu_custom_call.1} parent=1 // loop_pre_header
      _
    $region3: #{tpu_custom_call.1} parent=1 // loop_header
      %s15 = sphi 0, %s19
      %p16 = scmp.ge.s32.totalorder %s15, 4
      %s25 = sphi 0, %s27
      %s28 = sphi 0, %s25
      %s29 = sphi 0, %s28
      %s45 = sphi 0, %s29
      %s49 = sphi 0, %s49
      %s51 = sphi 0, %s49
      %s52 = sphi 0, %s51
      %s66 = sphi 0, %s52
      %s72 = sphi 0, %s74
      %s75 = sphi 0, %s72
      %s76 = sphi 0, %s75
      %s92 = sphi 0, %s76
    $region4: #{tpu_custom_call.1} parent=1 // loop_header_branch
      %18 = sbr.rel (%p16) target = $region8
    $region5: #{tpu_custom_call.1} parent=1 // loop_body
      %s20 = ssub.s32 %s15, 1
      %s21 = ssub.s32 %s15, 2
      %s22 = sadd.s32 %s15, 1
      %s23 = ssub.s32 %s15, %s22
      %p24 = scmp.eq.s32.totalorder %s23, 0
      %s26 = sadd.s32 %s25, 1
      %s27 = scalar_select %p24, %s25, %s26
      %p30 = pneg %p24
      %p31 = scmp.eq.s32.totalorder %s15, 1
      %p32 = por %p30, %p31
      %p33 = scmp.ne.s32.totalorder %s25, %s28
      %p34 = scmp.eq.s32.totalorder %s15, 0
      %p35 = por %p33, %p34
      %p36 = scmp.ne.s32.totalorder %s25, %s28
      %p37 = scmp.eq.s32.totalorder %s20, 1
      %p38 = por %p36, %p37
      %p39 = scmp.ne.s32.totalorder %s28, %s29
      %p40 = scmp.eq.s32.totalorder %s20, 0
      %p41 = por %p39, %p40
      %p42 = scmp.ne.s32.totalorder %s28, %s29
      %p43 = scmp.eq.s32.totalorder %s21, 1
      %p44 = por %p42, %p43
      %p46 = scmp.ne.s32.totalorder %s29, %s45
      %p47 = scmp.eq.s32.totalorder %s21, 0
      %p48 = por %p46, %p47
      %s50 = sadd.s32 %s49, 1
      %p53 = scmp.eq.s32.totalorder %s15, 1
      %p54 = scmp.ne.s32.totalorder %s49, %s51
      %p55 = scmp.eq.s32.totalorder %s15, 0
      %p56 = por %p54, %p55
      %p57 = scmp.ne.s32.totalorder %s49, %s51
      %p58 = scmp.eq.s32.totalorder %s20, 1
      %p59 = por %p57, %p58
      %p60 = scmp.ne.s32.totalorder %s51, %s52
      %p61 = scmp.eq.s32.totalorder %s20, 0
      %p62 = por %p60, %p61
      %p63 = scmp.ne.s32.totalorder %s51, %s52
      %p64 = scmp.eq.s32.totalorder %s21, 1
      %p65 = por %p63, %p64
      %p67 = scmp.ne.s32.totalorder %s52, %s66
      %p68 = scmp.eq.s32.totalorder %s21, 0
      %p69 = por %p67, %p68
      %s70 = ssub.s32 %s15, %s22
      %p71 = scmp.eq.s32.totalorder %s70, 0
      %s73 = sadd.s32 %s72, 1
      %s74 = scalar_select %p71, %s72, %s73
      %p77 = pneg %p71
      %p78 = scmp.eq.s32.totalorder %s15, 1
      %p79 = por %p77, %p78
      %p80 = scmp.ne.s32.totalorder %s72, %s75
      %p81 = scmp.eq.s32.totalorder %s15, 0
      %p82 = por %p80, %p81
      %p83 = scmp.ne.s32.totalorder %s72, %s75
      %p84 = scmp.eq.s32.totalorder %s20, 1
      %p85 = por %p83, %p84
      %p86 = scmp.ne.s32.totalorder %s75, %s76
      %p87 = scmp.eq.s32.totalorder %s20, 0
      %p88 = por %p86, %p87
      %p89 = scmp.ne.s32.totalorder %s75, %s76
      %p90 = scmp.eq.s32.totalorder %s21, 1
      %p91 = por %p89, %p90
      %p93 = scmp.ne.s32.totalorder %s76, %s92
      %p94 = scmp.eq.s32.totalorder %s21, 0
      %p95 = por %p93, %p94
      %p96 = scmp.le.s32.totalorder 1, %s15
      %p97 = scmp.lt.s32.totalorder %s15, 3
      %p98 = pnand %p96, %p97
      %p99 = pneg %p98
      // Predicated region
      $region9: #{tpu_custom_call.1} parent=5 // pred_check
        _
      $region10: #{tpu_custom_call.1} parent=5 // pred_check_branch
        %101 = sbr.rel (%p98) target = $region12
      $region11: #{tpu_custom_call.1} parent=5 // pred_region
        %s102 = ssub.s32 %s15, 1
        // Predicated region
        $region13: #{tpu_custom_call.1} parent=11 // pred_check
          %p103 = pneg %p62
        $region14: #{tpu_custom_call.1} parent=11 // pred_check_branch
          %105 = sbr.rel (%p103) target = $region16
        $region15: #{tpu_custom_call.1} parent=11 // pred_region
          %s107 = ssub.s32 1536, 1536
          %108 = vsyncadd [#allocation6], %s107
          %s109 = sshll.u32 [#allocation5], 4
          %s110 = int_to_ptr.vmem [resolvable:$true] %s109
          %115 = dma.hbm_to_vmem [thread:$0]  %s1, 1536, %s110, [#allocation6], 512, 512, 32
        $region16: #{tpu_custom_call.1} parent=11 // pred_fallthru
          _
      $region12: #{tpu_custom_call.1} parent=5 // pred_fallthru
        _
      %p116 = scmp.lt.s32.totalorder %s15, 2
      // Predicated region
      $region17: #{tpu_custom_call.1} parent=5 // pred_check
        %p117 = pneg %p116
      $region18: #{tpu_custom_call.1} parent=5 // pred_check_branch
        %119 = sbr.rel (%p117) target = $region20
      $region19: #{tpu_custom_call.1} parent=5 // pred_region
        // Predicated region
        $region21: #{tpu_custom_call.1} parent=19 // pred_check
          %p120 = pneg %p35
        $region22: #{tpu_custom_call.1} parent=19 // pred_check_branch
          %122 = sbr.rel (%p120) target = $region24
        $region23: #{tpu_custom_call.1} parent=19 // pred_region
          %s123 = sand.u32 %s25, 1
          %s124 = scalar_lea.sflag [#allocation3], %s123
          %s125 = sand.u32 %s25, 1
          %s126 = smul.addr %s125, 8
          %s127 = scalar_lea.vmem [#allocation2], %s126
          %s129 = ssub.s32 128, 128
          %130 = vsyncadd %s124, %s129
          %s131 = smul.addr %s15, 128
          %s132 = scalar_lea.hbm %s0, %s131
          %s134 = sshll.u32 %s127, 4
          %s135 = int_to_ptr.vmem [resolvable:$true] %s134
          %137 = dma.hbm_to_vmem [thread:$0]  %s132, 128, %s135, %s124
        $region24: #{tpu_custom_call.1} parent=19 // pred_fallthru
          _
      $region20: #{tpu_custom_call.1} parent=5 // pred_fallthru
        _
      %p138 = scmp.le.s32.totalorder 1, %s15
      %p139 = scmp.lt.s32.totalorder %s15, 3
      %p140 = pnand %p138, %p139
      %p141 = pneg %p140
      // Predicated region
      $region25: #{tpu_custom_call.1} parent=5 // pred_check
        _
      $region26: #{tpu_custom_call.1} parent=5 // pred_check_branch
        %143 = sbr.rel (%p140) target = $region28
      $region27: #{tpu_custom_call.1} parent=5 // pred_region
        %s144 = ssub.s32 %s15, 1
        %s145 = sand.u32 %s28, 1
        %s146 = scalar_lea.sflag [#allocation3], %s145
        %s147 = sand.u32 %s28, 1
        %s148 = smul.addr %s147, 8
        %s149 = scalar_lea.vmem [#allocation2], %s148
        // Predicated region
        $region29: #{tpu_custom_call.1} parent=27 // pred_check
          %p150 = pneg %p41
        $region30: #{tpu_custom_call.1} parent=27 // pred_check_branch
          %152 = sbr.rel (%p150) target = $region32
        $region31: #{tpu_custom_call.1} parent=27 // pred_region
          %153 = dma.done %s146, 128
        $region32: #{tpu_custom_call.1} parent=27 // pred_fallthru
          _
        // Predicated region
        $region33: #{tpu_custom_call.1} parent=27 // pred_check
          %p154 = pneg %p62
        $region34: #{tpu_custom_call.1} parent=27 // pred_check_branch
          %156 = sbr.rel (%p154) target = $region36
        $region35: #{tpu_custom_call.1} parent=27 // pred_region
          %157 = dma.done [#allocation6], 1536
        $region36: #{tpu_custom_call.1} parent=27 // pred_fallthru
          _
        %s158 = sand.u32 %s28, 1
        %s159 = scalar_lea.sflag [#allocation3], %s158
        %s160 = sand.u32 %s28, 1
        %s161 = smul.addr %s160, 8
        %s162 = scalar_lea.vmem [#allocation2], %s161
        %p163 = pneg %p41
        %p164 = pneg %p38
        %p165 = pneg %p62
        %p166 = pneg %p59
        %p167 = pneg %p88
        %p168 = pneg %p85
        %s169 = sand.u32 %s75, 1
        %s170 = scalar_lea.sflag [#allocation4], %s169
        %s171 = sand.u32 %s75, 1
        %s172 = smul.addr %s171, 32
        %s173 = scalar_lea.vmem [#allocation7], %s172
        %v174 = vld [vmem:[%s149] sm:$0xff]
        %vm175 = vcmp.ne.s32.totalorder %v174, 0
        %v176 = vsel %vm175, 1, 0
        %v177 = vcvt.s32.f32 %v176
        %v178 = vld [vmem:[#allocation5] sm:$0xff]
        %v179 = vld [vmem:[#allocation5 + $0x8] sm:$0xff]
        %v180 = vld [vmem:[#allocation5 + $0x10] sm:$0xff]
        %v181 = vld [vmem:[#allocation5 + $0x18] sm:$0xff]
        %v182 = vld [vmem:[#allocation5 + $0x20] sm:$0xff]
        %v183 = vld [vmem:[#allocation5 + $0x28] sm:$0xff]
        %v184 = vld [vmem:[#allocation5 + $0x30] sm:$0xff]
        %v185 = vld [vmem:[#allocation5 + $0x38] sm:$0xff]
        %v186 = vld [vmem:[#allocation5 + $0x40] sm:$0xff]
        %v187 = vld [vmem:[#allocation5 + $0x48] sm:$0xff]
        %v188 = vld [vmem:[#allocation5 + $0x50] sm:$0xff]
        %v189 = vld [vmem:[#allocation5 + $0x58] sm:$0xff]
        %vm190 = vcmask 195584
        %v192 = vsel %vm190, %v177, 0
        %v194 = vand.u32 %v179, 4294901760
        %195 = vmatprep.subr.mxu0 %v194
        %v196 = vand.u32 %v178, 4294901760
        %197 = vmatpush1.msra.mxu0 %v196
        %v198 = vand.u32 %v183, 4294901760
        %199 = vmatprep.subr.mxu0 %v198
        %v200 = vand.u32 %v182, 4294901760
        %201 = vmatpush1.msra.mxu0 %v200
        %v202 = vand.u32 %v187, 4294901760
        %203 = vmatprep.subr.mxu0 %v202
        %v204 = vand.u32 %v186, 4294901760
        %205 = vmatpush1.msra.mxu0 %v204
        %206 = vmatprep.subr.mxu0 0.0
        %207 = vmatpush1.msra.mxu0 0.0
        %208 = vmatprep.subr.mxu0 0.0
        %209 = vmatpush1.msra.mxu0 0.0
        %210 = vmatprep.subr.mxu0 0.0
        %211 = vmatpush1.msra.mxu0 0.0
        %212 = vmatprep.subr.mxu0 0.0
        %213 = vmatpush1.msra.mxu0 0.0
        %214 = vmatprep.subr.mxu0 0.0
        %215 = vmatpush1.msra.mxu0 0.0
        %216 = vmatprep.subr.mxu0 0.0
        %217 = vmatpush1.msra.mxu0 0.0
        %218 = vmatprep.subr.mxu0 0.0
        %219 = vmatpush1.msra.mxu0 0.0
        %220 = vmatprep.subr.mxu0 0.0
        %221 = vmatpush1.msra.mxu0 0.0
        %222 = vmatprep.subr.mxu0 0.0
        %223 = vmatpush1.msra.mxu0 0.0
        %224 = vmatprep.subr.mxu0 0.0
        %225 = vmatpush1.msra.mxu0 0.0
        %226 = vmatprep.subr.mxu0 0.0
        %227 = vmatpush1.msra.mxu0 0.0
        %228 = vmatprep.subr.mxu0 0.0
        %229 = vmatpush1.msra.mxu0 0.0
        %230 = vmatprep.subr.mxu0 0.0
        %231 = vmatpush1.msra.mxu0 0.0
        %232 = vmatprep.subr.mxu0 0.0
        %233 = vmatpush1.msra.mxu0 0.0
        %234 = vmatprep.subr.mxu0 0.0
        %235 = vmatpush1.msra.mxu0 0.0
        %236 = vmatprep.subr.mxu0 0.0
        %237 = vmatpush1.msra.mxu0 0.0
        %238 = vmatprep.subr.mxu0 0.0
        %239 = vmatpush1.msra.mxu0 0.0
        %240 = vmatprep.subr.mxu0 0.0
        %241 = vmatpush1.msra.mxu0 0.0
        %242 = vmatprep.subr.mxu0 0.0
        %243 = vmatpush1.msra.mxu0 0.0
        %244 = vmatprep.subr.mxu0 0.0
        %245 = vmatpush1.msra.mxu0 0.0
        %246 = vmatprep.subr.mxu0 0.0
        %247 = vmatpush1.msra.mxu0 0.0
        %248 = vmatprep.subr.mxu0 0.0
        %249 = vmatpush1.msra.mxu0 0.0
        %250 = vmatprep.subr.mxu0 0.0
        %251 = vmatpush1.msra.mxu0 0.0
        %252 = vmatprep.subr.mxu0 0.0
        %253 = vmatpush1.msra.mxu0 0.0
        %254 = vmatprep.subr.mxu0 0.0
        %255 = vmatpush1.msra.mxu0 0.0
        %256 = vmatprep.subr.mxu0 0.0
        %257 = vmatpush1.msra.mxu0 0.0
        %258 = vmatprep.subr.mxu0 0.0
        %259 = vmatpush1.msra.mxu0 0.0
        %260 = vmatprep.subr.mxu0 0.0
        %261 = vmatpush1.msra.mxu0 0.0
        %262 = vmatprep.subr.mxu0 0.0
        %263 = vmatpush1.msra.mxu0 0.0
        %264 = vmatprep.mubr.f32.mxu0 0.0
        %v265 = vand.u32 %v192, 4294901760
        %v266 = vsub.f32 %v192, %v265
        %v267 = vand.u32 %v266, 4294901760
        %v268 = vsub.f32 %v266, %v267
        %v269 = vand.u32 %v268, 4294901760
        %270 = vmatmul.mubr.f32.gmra.mrb[0].mxu0 %v269
        %v271 = vpop.f32.mrb[0].mxu0
        %v272 = vadd.f32 0.0, %v271
        %v273 = vpop.f32.mrb[0].mxu0
        %v274 = vadd.f32 0.0, %v273
        %275 = vdwg.mxu0
        %v276 = vand.u32 %v179, 4294901760
        %v277 = vsub.f32 %v179, %v276
        %v278 = vand.u32 %v277, 4294901760
        %v279 = vsub.f32 %v277, %v278
        %v280 = vand.u32 %v279, 4294901760
        %281 = vmatprep.subr.mxu0 %v280
        %v282 = vand.u32 %v178, 4294901760
        %v283 = vsub.f32 %v178, %v282
        %v284 = vand.u32 %v283, 4294901760
        %v285 = vsub.f32 %v283, %v284
        %v286 = vand.u32 %v285, 4294901760
        %287 = vmatpush1.msra.mxu0 %v286
        %v288 = vand.u32 %v183, 4294901760
        %v289 = vsub.f32 %v183, %v288
        %v290 = vand.u32 %v289, 4294901760
        %v291 = vsub.f32 %v289, %v290
        %v292 = vand.u32 %v291, 4294901760
        %293 = vmatprep.subr.mxu0 %v292
        %v294 = vand.u32 %v182, 4294901760
        %v295 = vsub.f32 %v182, %v294
        %v296 = vand.u32 %v295, 4294901760
        %v297 = vsub.f32 %v295, %v296
        %v298 = vand.u32 %v297, 4294901760
        %299 = vmatpush1.msra.mxu0 %v298
        %v300 = vand.u32 %v187, 4294901760
        %v301 = vsub.f32 %v187, %v300
        %v302 = vand.u32 %v301, 4294901760
        %v303 = vsub.f32 %v301, %v302
        %v304 = vand.u32 %v303, 4294901760
        %305 = vmatprep.subr.mxu0 %v304
        %v306 = vand.u32 %v186, 4294901760
        %v307 = vsub.f32 %v186, %v306
        %v308 = vand.u32 %v307, 4294901760
        %v309 = vsub.f32 %v307, %v308
        %v310 = vand.u32 %v309, 4294901760
        %311 = vmatpush1.msra.mxu0 %v310
        %312 = vmatprep.subr.mxu0 0.0
        %313 = vmatpush1.msra.mxu0 0.0
        %314 = vmatprep.subr.mxu0 0.0
        %315 = vmatpush1.msra.mxu0 0.0
        %316 = vmatprep.subr.mxu0 0.0
        %317 = vmatpush1.msra.mxu0 0.0
        %318 = vmatprep.subr.mxu0 0.0
        %319 = vmatpush1.msra.mxu0 0.0
        %320 = vmatprep.subr.mxu0 0.0
        %321 = vmatpush1.msra.mxu0 0.0
        %322 = vmatprep.subr.mxu0 0.0
        %323 = vmatpush1.msra.mxu0 0.0
        %324 = vmatprep.subr.mxu0 0.0
        %325 = vmatpush1.msra.mxu0 0.0
        %326 = vmatprep.subr.mxu0 0.0
        %327 = vmatpush1.msra.mxu0 0.0
        %328 = vmatprep.subr.mxu0 0.0
        %329 = vmatpush1.msra.mxu0 0.0
        %330 = vmatprep.subr.mxu0 0.0
        %331 = vmatpush1.msra.mxu0 0.0
        %332 = vmatprep.subr.mxu0 0.0
        %333 = vmatpush1.msra.mxu0 0.0
        %334 = vmatprep.subr.mxu0 0.0
        %335 = vmatpush1.msra.mxu0 0.0
        %336 = vmatprep.subr.mxu0 0.0
        %337 = vmatpush1.msra.mxu0 0.0
        %338 = vmatprep.subr.mxu0 0.0
        %339 = vmatpush1.msra.mxu0 0.0
        %340 = vmatprep.subr.mxu0 0.0
        %341 = vmatpush1.msra.mxu0 0.0
        %342 = vmatprep.subr.mxu0 0.0
        %343 = vmatpush1.msra.mxu0 0.0
        %344 = vmatprep.subr.mxu0 0.0
        %345 = vmatpush1.msra.mxu0 0.0
        %346 = vmatprep.subr.mxu0 0.0
        %347 = vmatpush1.msra.mxu0 0.0
        %348 = vmatprep.subr.mxu0 0.0
        %349 = vmatpush1.msra.mxu0 0.0
        %350 = vmatprep.subr.mxu0 0.0
        %351 = vmatpush1.msra.mxu0 0.0
        %352 = vmatprep.subr.mxu0 0.0
        %353 = vmatpush1.msra.mxu0 0.0
        %354 = vmatprep.subr.mxu0 0.0
        %355 = vmatpush1.msra.mxu0 0.0
        %356 = vmatprep.subr.mxu0 0.0
        %357 = vmatpush1.msra.mxu0 0.0
        %358 = vmatprep.subr.mxu0 0.0
        %359 = vmatpush1.msra.mxu0 0.0
        %360 = vmatprep.subr.mxu0 0.0
        %361 = vmatpush1.msra.mxu0 0.0
        %362 = vmatprep.subr.mxu0 0.0
        %363 = vmatpush1.msra.mxu0 0.0
        %364 = vmatprep.subr.mxu0 0.0
        %365 = vmatpush1.msra.mxu0 0.0
        %366 = vmatprep.subr.mxu0 0.0
        %367 = vmatpush1.msra.mxu0 0.0
        %368 = vmatprep.subr.mxu0 0.0
        %369 = vmatpush1.msra.mxu0 0.0
        %370 = vmatprep.mubr.f32.mxu0 0.0
        %v371 = vand.u32 %v192, 4294901760
        %372 = vmatmul.mubr.f32.gmra.mrb[0].mxu0 %v371
        %v373 = vpop.f32.mrb[0].mxu0
        %v374 = vadd.f32 %v272, %v373
        %v375 = vpop.f32.mrb[0].mxu0
        %v376 = vadd.f32 %v274, %v375
        %377 = vdwg.mxu0
        %v378 = vand.u32 %v179, 4294901760
        %v379 = vsub.f32 %v179, %v378
        %380 = vmatprep.subr.mxu0 %v379
        %v381 = vand.u32 %v178, 4294901760
        %v382 = vsub.f32 %v178, %v381
        %383 = vmatpush1.msra.mxu0 %v382
        %v384 = vand.u32 %v183, 4294901760
        %v385 = vsub.f32 %v183, %v384
        %386 = vmatprep.subr.mxu0 %v385
        %v387 = vand.u32 %v182, 4294901760
        %v388 = vsub.f32 %v182, %v387
        %389 = vmatpush1.msra.mxu0 %v388
        %v390 = vand.u32 %v187, 4294901760
        %v391 = vsub.f32 %v187, %v390
        %392 = vmatprep.subr.mxu0 %v391
        %v393 = vand.u32 %v186, 4294901760
        %v394 = vsub.f32 %v186, %v393
        %395 = vmatpush1.msra.mxu0 %v394
        %396 = vmatprep.subr.mxu0 0.0
        %397 = vmatpush1.msra.mxu0 0.0
        %398 = vmatprep.subr.mxu0 0.0
        %399 = vmatpush1.msra.mxu0 0.0
        %400 = vmatprep.subr.mxu0 0.0
        %401 = vmatpush1.msra.mxu0 0.0
        %402 = vmatprep.subr.mxu0 0.0
        %403 = vmatpush1.msra.mxu0 0.0
        %404 = vmatprep.subr.mxu0 0.0
        %405 = vmatpush1.msra.mxu0 0.0
        %406 = vmatprep.subr.mxu0 0.0
        %407 = vmatpush1.msra.mxu0 0.0
        %408 = vmatprep.subr.mxu0 0.0
        %409 = vmatpush1.msra.mxu0 0.0
        %410 = vmatprep.subr.mxu0 0.0
        %411 = vmatpush1.msra.mxu0 0.0
        %412 = vmatprep.subr.mxu0 0.0
        %413 = vmatpush1.msra.mxu0 0.0
        %414 = vmatprep.subr.mxu0 0.0
        %415 = vmatpush1.msra.mxu0 0.0
        %416 = vmatprep.subr.mxu0 0.0
        %417 = vmatpush1.msra.mxu0 0.0
        %418 = vmatprep.subr.mxu0 0.0
        %419 = vmatpush1.msra.mxu0 0.0
        %420 = vmatprep.subr.mxu0 0.0
        %421 = vmatpush1.msra.mxu0 0.0
        %422 = vmatprep.subr.mxu0 0.0
        %423 = vmatpush1.msra.mxu0 0.0
        %424 = vmatprep.subr.mxu0 0.0
        %425 = vmatpush1.msra.mxu0 0.0
        %426 = vmatprep.subr.mxu0 0.0
        %427 = vmatpush1.msra.mxu0 0.0
        %428 = vmatprep.subr.mxu0 0.0
        %429 = vmatpush1.msra.mxu0 0.0
        %430 = vmatprep.subr.mxu0 0.0
        %431 = vmatpush1.msra.mxu0 0.0
        %432 = vmatprep.subr.mxu0 0.0
        %433 = vmatpush1.msra.mxu0 0.0
        %434 = vmatprep.subr.mxu0 0.0
        %435 = vmatpush1.msra.mxu0 0.0
        %436 = vmatprep.subr.mxu0 0.0
        %437 = vmatpush1.msra.mxu0 0.0
        %438 = vmatprep.subr.mxu0 0.0
        %439 = vmatpush1.msra.mxu0 0.0
        %440 = vmatprep.subr.mxu0 0.0
        %441 = vmatpush1.msra.mxu0 0.0
        %442 = vmatprep.subr.mxu0 0.0
        %443 = vmatpush1.msra.mxu0 0.0
        %444 = vmatprep.subr.mxu0 0.0
        %445 = vmatpush1.msra.mxu0 0.0
        %446 = vmatprep.subr.mxu0 0.0
        %447 = vmatpush1.msra.mxu0 0.0
        %448 = vmatprep.subr.mxu0 0.0
        %449 = vmatpush1.msra.mxu0 0.0
        %450 = vmatprep.subr.mxu0 0.0
        %451 = vmatpush1.msra.mxu0 0.0
        %452 = vmatprep.subr.mxu0 0.0
        %453 = vmatpush1.msra.mxu0 0.0
        %454 = vmatprep.mubr.f32.mxu0 0.0
        %v455 = vand.u32 %v192, 4294901760
        %v456 = vsub.f32 %v192, %v455
        %457 = vmatmul.mubr.f32.gmra.mrb[0].mxu0 %v456
        %v458 = vpop.f32.mrb[0].mxu0
        %v459 = vadd.f32 %v374, %v458
        %v460 = vpop.f32.mrb[0].mxu0
        %v461 = vadd.f32 %v376, %v460
        %462 = vdwg.mxu0
        %v463 = vand.u32 %v179, 4294901760
        %464 = vmatprep.subr.mxu0 %v463
        %v465 = vand.u32 %v178, 4294901760
        %466 = vmatpush1.msra.mxu0 %v465
        %v467 = vand.u32 %v183, 4294901760
        %468 = vmatprep.subr.mxu0 %v467
        %v469 = vand.u32 %v182, 4294901760
        %470 = vmatpush1.msra.mxu0 %v469
        %v471 = vand.u32 %v187, 4294901760
        %472 = vmatprep.subr.mxu0 %v471
        %v473 = vand.u32 %v186, 4294901760
        %474 = vmatpush1.msra.mxu0 %v473
        %475 = vmatprep.subr.mxu0 0.0
        %476 = vmatpush1.msra.mxu0 0.0
        %477 = vmatprep.subr.mxu0 0.0
        %478 = vmatpush1.msra.mxu0 0.0
        %479 = vmatprep.subr.mxu0 0.0
        %480 = vmatpush1.msra.mxu0 0.0
        %481 = vmatprep.subr.mxu0 0.0
        %482 = vmatpush1.msra.mxu0 0.0
        %483 = vmatprep.subr.mxu0 0.0
        %484 = vmatpush1.msra.mxu0 0.0
        %485 = vmatprep.subr.mxu0 0.0
        %486 = vmatpush1.msra.mxu0 0.0
        %487 = vmatprep.subr.mxu0 0.0
        %488 = vmatpush1.msra.mxu0 0.0
        %489 = vmatprep.subr.mxu0 0.0
        %490 = vmatpush1.msra.mxu0 0.0
        %491 = vmatprep.subr.mxu0 0.0
        %492 = vmatpush1.msra.mxu0 0.0
        %493 = vmatprep.subr.mxu0 0.0
        %494 = vmatpush1.msra.mxu0 0.0
        %495 = vmatprep.subr.mxu0 0.0
        %496 = vmatpush1.msra.mxu0 0.0
        %497 = vmatprep.subr.mxu0 0.0
        %498 = vmatpush1.msra.mxu0 0.0
        %499 = vmatprep.subr.mxu0 0.0
        %500 = vmatpush1.msra.mxu0 0.0
        %501 = vmatprep.subr.mxu0 0.0
        %502 = vmatpush1.msra.mxu0 0.0
        %503 = vmatprep.subr.mxu0 0.0
        %504 = vmatpush1.msra.mxu0 0.0
        %505 = vmatprep.subr.mxu0 0.0
        %506 = vmatpush1.msra.mxu0 0.0
        %507 = vmatprep.subr.mxu0 0.0
        %508 = vmatpush1.msra.mxu0 0.0
        %509 = vmatprep.subr.mxu0 0.0
        %510 = vmatpush1.msra.mxu0 0.0
        %511 = vmatprep.subr.mxu0 0.0
        %512 = vmatpush1.msra.mxu0 0.0
        %513 = vmatprep.subr.mxu0 0.0
        %514 = vmatpush1.msra.mxu0 0.0
        %515 = vmatprep.subr.mxu0 0.0
        %516 = vmatpush1.msra.mxu0 0.0
        %517 = vmatprep.subr.mxu0 0.0
        %518 = vmatpush1.msra.mxu0 0.0
        %519 = vmatprep.subr.mxu0 0.0
        %520 = vmatpush1.msra.mxu0 0.0
        %521 = vmatprep.subr.mxu0 0.0
        %522 = vmatpush1.msra.mxu0 0.0
        %523 = vmatprep.subr.mxu0 0.0
        %524 = vmatpush1.msra.mxu0 0.0
        %525 = vmatprep.subr.mxu0 0.0
        %526 = vmatpush1.msra.mxu0 0.0
        %527 = vmatprep.subr.mxu0 0.0
        %528 = vmatpush1.msra.mxu0 0.0
        %529 = vmatprep.subr.mxu0 0.0
        %530 = vmatpush1.msra.mxu0 0.0
        %531 = vmatprep.subr.mxu0 0.0
        %532 = vmatpush1.msra.mxu0 0.0
        %533 = vmatprep.mubr.f32.mxu0 0.0
        %v534 = vand.u32 %v192, 4294901760
        %v535 = vsub.f32 %v192, %v534
        %v536 = vand.u32 %v535, 4294901760
        %537 = vmatmul.mubr.f32.gmra.mrb[0].mxu0 %v536
        %v538 = vpop.f32.mrb[0].mxu0
        %v539 = vadd.f32 %v459, %v538
        %v540 = vpop.f32.mrb[0].mxu0
        %v541 = vadd.f32 %v461, %v540
        %542 = vdwg.mxu0
        %v543 = vand.u32 %v179, 4294901760
        %v544 = vsub.f32 %v179, %v543
        %v545 = vand.u32 %v544, 4294901760
        %546 = vmatprep.subr.mxu0 %v545
        %v547 = vand.u32 %v178, 4294901760
        %v548 = vsub.f32 %v178, %v547
        %v549 = vand.u32 %v548, 4294901760
        %550 = vmatpush1.msra.mxu0 %v549
        %v551 = vand.u32 %v183, 4294901760
        %v552 = vsub.f32 %v183, %v551
        %v553 = vand.u32 %v552, 4294901760
        %554 = vmatprep.subr.mxu0 %v553
        %v555 = vand.u32 %v182, 4294901760
        %v556 = vsub.f32 %v182, %v555
        %v557 = vand.u32 %v556, 4294901760
        %558 = vmatpush1.msra.mxu0 %v557
        %v559 = vand.u32 %v187, 4294901760
        %v560 = vsub.f32 %v187, %v559
        %v561 = vand.u32 %v560, 4294901760
        %562 = vmatprep.subr.mxu0 %v561
        %v563 = vand.u32 %v186, 4294901760
        %v564 = vsub.f32 %v186, %v563
        %v565 = vand.u32 %v564, 4294901760
        %566 = vmatpush1.msra.mxu0 %v565
        %567 = vmatprep.subr.mxu0 0.0
        %568 = vmatpush1.msra.mxu0 0.0
        %569 = vmatprep.subr.mxu0 0.0
        %570 = vmatpush1.msra.mxu0 0.0
        %571 = vmatprep.subr.mxu0 0.0
        %572 = vmatpush1.msra.mxu0 0.0
        %573 = vmatprep.subr.mxu0 0.0
        %574 = vmatpush1.msra.mxu0 0.0
        %575 = vmatprep.subr.mxu0 0.0
        %576 = vmatpush1.msra.mxu0 0.0
        %577 = vmatprep.subr.mxu0 0.0
        %578 = vmatpush1.msra.mxu0 0.0
        %579 = vmatprep.subr.mxu0 0.0
        %580 = vmatpush1.msra.mxu0 0.0
        %581 = vmatprep.subr.mxu0 0.0
        %582 = vmatpush1.msra.mxu0 0.0
        %583 = vmatprep.subr.mxu0 0.0
        %584 = vmatpush1.msra.mxu0 0.0
        %585 = vmatprep.subr.mxu0 0.0
        %586 = vmatpush1.msra.mxu0 0.0
        %587 = vmatprep.subr.mxu0 0.0
        %588 = vmatpush1.msra.mxu0 0.0
        %589 = vmatprep.subr.mxu0 0.0
        %590 = vmatpush1.msra.mxu0 0.0
        %591 = vmatprep.subr.mxu0 0.0
        %592 = vmatpush1.msra.mxu0 0.0
        %593 = vmatprep.subr.mxu0 0.0
        %594 = vmatpush1.msra.mxu0 0.0
        %595 = vmatprep.subr.mxu0 0.0
        %596 = vmatpush1.msra.mxu0 0.0
        %597 = vmatprep.subr.mxu0 0.0
        %598 = vmatpush1.msra.mxu0 0.0
        %599 = vmatprep.subr.mxu0 0.0
        %600 = vmatpush1.msra.mxu0 0.0
        %601 = vmatprep.subr.mxu0 0.0
        %602 = vmatpush1.msra.mxu0 0.0
        %603 = vmatprep.subr.mxu0 0.0
        %604 = vmatpush1.msra.mxu0 0.0
        %605 = vmatprep.subr.mxu0 0.0
        %606 = vmatpush1.msra.mxu0 0.0
        %607 = vmatprep.subr.mxu0 0.0
        %608 = vmatpush1.msra.mxu0 0.0
        %609 = vmatprep.subr.mxu0 0.0
        %610 = vmatpush1.msra.mxu0 0.0
        %611 = vmatprep.subr.mxu0 0.0
        %612 = vmatpush1.msra.mxu0 0.0
        %613 = vmatprep.subr.mxu0 0.0
        %614 = vmatpush1.msra.mxu0 0.0
        %615 = vmatprep.subr.mxu0 0.0
        %616 = vmatpush1.msra.mxu0 0.0
        %617 = vmatprep.subr.mxu0 0.0
        %618 = vmatpush1.msra.mxu0 0.0
        %619 = vmatprep.subr.mxu0 0.0
        %620 = vmatpush1.msra.mxu0 0.0
        %621 = vmatprep.subr.mxu0 0.0
        %622 = vmatpush1.msra.mxu0 0.0
        %623 = vmatprep.subr.mxu0 0.0
        %624 = vmatpush1.msra.mxu0 0.0
        %625 = vmatprep.mubr.f32.mxu0 0.0
        %v626 = vand.u32 %v192, 4294901760
        %627 = vmatmul.mubr.f32.gmra.mrb[0].mxu0 %v626
        %v628 = vpop.f32.mrb[0].mxu0
        %v629 = vadd.f32 %v539, %v628
        %v630 = vpop.f32.mrb[0].mxu0
        %v631 = vadd.f32 %v541, %v630
        %632 = vdwg.mxu0
        %v633 = vand.u32 %v179, 4294901760
        %634 = vmatprep.subr.mxu0 %v633
        %v635 = vand.u32 %v178, 4294901760
        %636 = vmatpush1.msra.mxu0 %v635
        %v637 = vand.u32 %v183, 4294901760
        %638 = vmatprep.subr.mxu0 %v637
        %v639 = vand.u32 %v182, 4294901760
        %640 = vmatpush1.msra.mxu0 %v639
        %v641 = vand.u32 %v187, 4294901760
        %642 = vmatprep.subr.mxu0 %v641
        %v643 = vand.u32 %v186, 4294901760
        %644 = vmatpush1.msra.mxu0 %v643
        %645 = vmatprep.subr.mxu0 0.0
        %646 = vmatpush1.msra.mxu0 0.0
        %647 = vmatprep.subr.mxu0 0.0
        %648 = vmatpush1.msra.mxu0 0.0
        %649 = vmatprep.subr.mxu0 0.0
        %650 = vmatpush1.msra.mxu0 0.0
        %651 = vmatprep.subr.mxu0 0.0
        %652 = vmatpush1.msra.mxu0 0.0
        %653 = vmatprep.subr.mxu0 0.0
        %654 = vmatpush1.msra.mxu0 0.0
        %655 = vmatprep.subr.mxu0 0.0
        %656 = vmatpush1.msra.mxu0 0.0
        %657 = vmatprep.subr.mxu0 0.0
        %658 = vmatpush1.msra.mxu0 0.0
        %659 = vmatprep.subr.mxu0 0.0
        %660 = vmatpush1.msra.mxu0 0.0
        %661 = vmatprep.subr.mxu0 0.0
        %662 = vmatpush1.msra.mxu0 0.0
        %663 = vmatprep.subr.mxu0 0.0
        %664 = vmatpush1.msra.mxu0 0.0
        %665 = vmatprep.subr.mxu0 0.0
        %666 = vmatpush1.msra.mxu0 0.0
        %667 = vmatprep.subr.mxu0 0.0
        %668 = vmatpush1.msra.mxu0 0.0
        %669 = vmatprep.subr.mxu0 0.0
        %670 = vmatpush1.msra.mxu0 0.0
        %671 = vmatprep.subr.mxu0 0.0
        %672 = vmatpush1.msra.mxu0 0.0
        %673 = vmatprep.subr.mxu0 0.0
        %674 = vmatpush1.msra.mxu0 0.0
        %675 = vmatprep.subr.mxu0 0.0
        %676 = vmatpush1.msra.mxu0 0.0
        %677 = vmatprep.subr.mxu0 0.0
        %678 = vmatpush1.msra.mxu0 0.0
        %679 = vmatprep.subr.mxu0 0.0
        %680 = vmatpush1.msra.mxu0 0.0
        %681 = vmatprep.subr.mxu0 0.0
        %682 = vmatpush1.msra.mxu0 0.0
        %683 = vmatprep.subr.mxu0 0.0
        %684 = vmatpush1.msra.mxu0 0.0
        %685 = vmatprep.subr.mxu0 0.0
        %686 = vmatpush1.msra.mxu0 0.0
        %687 = vmatprep.subr.mxu0 0.0
        %688 = vmatpush1.msra.mxu0 0.0
        %689 = vmatprep.subr.mxu0 0.0
        %690 = vmatpush1.msra.mxu0 0.0
        %691 = vmatprep.subr.mxu0 0.0
        %692 = vmatpush1.msra.mxu0 0.0
        %693 = vmatprep.subr.mxu0 0.0
        %694 = vmatpush1.msra.mxu0 0.0
        %695 = vmatprep.subr.mxu0 0.0
        %696 = vmatpush1.msra.mxu0 0.0
        %697 = vmatprep.subr.mxu0 0.0
        %698 = vmatpush1.msra.mxu0 0.0
        %699 = vmatprep.subr.mxu0 0.0
        %700 = vmatpush1.msra.mxu0 0.0
        %701 = vmatprep.subr.mxu0 0.0
        %702 = vmatpush1.msra.mxu0 0.0
        %703 = vmatprep.mubr.f32.mxu0 0.0
        %v704 = vand.u32 %v192, 4294901760
        %705 = vmatmul.mubr.f32.gmra.mrb[0].mxu0 %v704
        %v706 = vpop.f32.mrb[0].mxu0
        %v707 = vadd.f32 %v629, %v706
        %v708 = vpop.f32.mrb[0].mxu0
        %v709 = vadd.f32 %v631, %v708
        %710 = vdwg.mxu0
        %v711 = vand.u32 %v181, 4294901760
        %712 = vmatprep.subr.mxu0 %v711
        %v713 = vand.u32 %v180, 4294901760
        %714 = vmatpush1.msra.mxu0 %v713
        %v715 = vand.u32 %v185, 4294901760
        %716 = vmatprep.subr.mxu0 %v715
        %v717 = vand.u32 %v184, 4294901760
        %718 = vmatpush1.msra.mxu0 %v717
        %v719 = vand.u32 %v189, 4294901760
        %720 = vmatprep.subr.mxu0 %v719
        %v721 = vand.u32 %v188, 4294901760
        %722 = vmatpush1.msra.mxu0 %v721
        %723 = vmatprep.subr.mxu0 0.0
        %724 = vmatpush1.msra.mxu0 0.0
        %725 = vmatprep.subr.mxu0 0.0
        %726 = vmatpush1.msra.mxu0 0.0
        %727 = vmatprep.subr.mxu0 0.0
        %728 = vmatpush1.msra.mxu0 0.0
        %729 = vmatprep.subr.mxu0 0.0
        %730 = vmatpush1.msra.mxu0 0.0
        %731 = vmatprep.subr.mxu0 0.0
        %732 = vmatpush1.msra.mxu0 0.0
        %733 = vmatprep.subr.mxu0 0.0
        %734 = vmatpush1.msra.mxu0 0.0
        %735 = vmatprep.subr.mxu0 0.0
        %736 = vmatpush1.msra.mxu0 0.0
        %737 = vmatprep.subr.mxu0 0.0
        %738 = vmatpush1.msra.mxu0 0.0
        %739 = vmatprep.subr.mxu0 0.0
        %740 = vmatpush1.msra.mxu0 0.0
        %741 = vmatprep.subr.mxu0 0.0
        %742 = vmatpush1.msra.mxu0 0.0
        %743 = vmatprep.subr.mxu0 0.0
        %744 = vmatpush1.msra.mxu0 0.0
        %745 = vmatprep.subr.mxu0 0.0
        %746 = vmatpush1.msra.mxu0 0.0
        %747 = vmatprep.subr.mxu0 0.0
        %748 = vmatpush1.msra.mxu0 0.0
        %749 = vmatprep.subr.mxu0 0.0
        %750 = vmatpush1.msra.mxu0 0.0
        %751 = vmatprep.subr.mxu0 0.0
        %752 = vmatpush1.msra.mxu0 0.0
        %753 = vmatprep.subr.mxu0 0.0
        %754 = vmatpush1.msra.mxu0 0.0
        %755 = vmatprep.subr.mxu0 0.0
        %756 = vmatpush1.msra.mxu0 0.0
        %757 = vmatprep.subr.mxu0 0.0
        %758 = vmatpush1.msra.mxu0 0.0
        %759 = vmatprep.subr.mxu0 0.0
        %760 = vmatpush1.msra.mxu0 0.0
        %761 = vmatprep.subr.mxu0 0.0
        %762 = vmatpush1.msra.mxu0 0.0
        %763 = vmatprep.subr.mxu0 0.0
        %764 = vmatpush1.msra.mxu0 0.0
        %765 = vmatprep.subr.mxu0 0.0
        %766 = vmatpush1.msra.mxu0 0.0
        %767 = vmatprep.subr.mxu0 0.0
        %768 = vmatpush1.msra.mxu0 0.0
        %769 = vmatprep.subr.mxu0 0.0
        %770 = vmatpush1.msra.mxu0 0.0
        %771 = vmatprep.subr.mxu0 0.0
        %772 = vmatpush1.msra.mxu0 0.0
        %773 = vmatprep.subr.mxu0 0.0
        %774 = vmatpush1.msra.mxu0 0.0
        %775 = vmatprep.subr.mxu0 0.0
        %776 = vmatpush1.msra.mxu0 0.0
        %777 = vmatprep.subr.mxu0 0.0
        %778 = vmatpush1.msra.mxu0 0.0
        %779 = vmatprep.subr.mxu0 0.0
        %780 = vmatpush1.msra.mxu0 0.0
        %781 = vmatprep.mubr.f32.mxu0 0.0
        %v782 = vand.u32 %v192, 4294901760
        %v783 = vsub.f32 %v192, %v782
        %v784 = vand.u32 %v783, 4294901760
        %v785 = vsub.f32 %v783, %v784
        %v786 = vand.u32 %v785, 4294901760
        %787 = vmatmul.mubr.f32.gmra.mrb[0].mxu0 %v786
        %v788 = vpop.f32.mrb[0].mxu0
        %v789 = vadd.f32 0.0, %v788
        %v790 = vpop.f32.mrb[0].mxu0
        %v791 = vadd.f32 0.0, %v790
        %792 = vdwg.mxu0
        %v793 = vand.u32 %v181, 4294901760
        %v794 = vsub.f32 %v181, %v793
        %v795 = vand.u32 %v794, 4294901760
        %v796 = vsub.f32 %v794, %v795
        %v797 = vand.u32 %v796, 4294901760
        %798 = vmatprep.subr.mxu0 %v797
        %v799 = vand.u32 %v180, 4294901760
        %v800 = vsub.f32 %v180, %v799
        %v801 = vand.u32 %v800, 4294901760
        %v802 = vsub.f32 %v800, %v801
        %v803 = vand.u32 %v802, 4294901760
        %804 = vmatpush1.msra.mxu0 %v803
        %v805 = vand.u32 %v185, 4294901760
        %v806 = vsub.f32 %v185, %v805
        %v807 = vand.u32 %v806, 4294901760
        %v808 = vsub.f32 %v806, %v807
        %v809 = vand.u32 %v808, 4294901760
        %810 = vmatprep.subr.mxu0 %v809
        %v811 = vand.u32 %v184, 4294901760
        %v812 = vsub.f32 %v184, %v811
        %v813 = vand.u32 %v812, 4294901760
        %v814 = vsub.f32 %v812, %v813
        %v815 = vand.u32 %v814, 4294901760
        %816 = vmatpush1.msra.mxu0 %v815
        %v817 = vand.u32 %v189, 4294901760
        %v818 = vsub.f32 %v189, %v817
        %v819 = vand.u32 %v818, 4294901760
        %v820 = vsub.f32 %v818, %v819
        %v821 = vand.u32 %v820, 4294901760
        %822 = vmatprep.subr.mxu0 %v821
        %v823 = vand.u32 %v188, 4294901760
        %v824 = vsub.f32 %v188, %v823
        %v825 = vand.u32 %v824, 4294901760
        %v826 = vsub.f32 %v824, %v825
        %v827 = vand.u32 %v826, 4294901760
        %828 = vmatpush1.msra.mxu0 %v827
        %829 = vmatprep.subr.mxu0 0.0
        %830 = vmatpush1.msra.mxu0 0.0
        %831 = vmatprep.subr.mxu0 0.0
        %832 = vmatpush1.msra.mxu0 0.0
        %833 = vmatprep.subr.mxu0 0.0
        %834 = vmatpush1.msra.mxu0 0.0
        %835 = vmatprep.subr.mxu0 0.0
        %836 = vmatpush1.msra.mxu0 0.0
        %837 = vmatprep.subr.mxu0 0.0
        %838 = vmatpush1.msra.mxu0 0.0
        %839 = vmatprep.subr.mxu0 0.0
        %840 = vmatpush1.msra.mxu0 0.0
        %841 = vmatprep.subr.mxu0 0.0
        %842 = vmatpush1.msra.mxu0 0.0
        %843 = vmatprep.subr.mxu0 0.0
        %844 = vmatpush1.msra.mxu0 0.0
        %845 = vmatprep.subr.mxu0 0.0
        %846 = vmatpush1.msra.mxu0 0.0
        %847 = vmatprep.subr.mxu0 0.0
        %848 = vmatpush1.msra.mxu0 0.0
        %849 = vmatprep.subr.mxu0 0.0
        %850 = vmatpush1.msra.mxu0 0.0
        %851 = vmatprep.subr.mxu0 0.0
        %852 = vmatpush1.msra.mxu0 0.0
        %853 = vmatprep.subr.mxu0 0.0
        %854 = vmatpush1.msra.mxu0 0.0
        %855 = vmatprep.subr.mxu0 0.0
        %856 = vmatpush1.msra.mxu0 0.0
        %857 = vmatprep.subr.mxu0 0.0
        %858 = vmatpush1.msra.mxu0 0.0
        %859 = vmatprep.subr.mxu0 0.0
        %860 = vmatpush1.msra.mxu0 0.0
        %861 = vmatprep.subr.mxu0 0.0
        %862 = vmatpush1.msra.mxu0 0.0
        %863 = vmatprep.subr.mxu0 0.0
        %864 = vmatpush1.msra.mxu0 0.0
        %865 = vmatprep.subr.mxu0 0.0
        %866 = vmatpush1.msra.mxu0 0.0
        %867 = vmatprep.subr.mxu0 0.0
        %868 = vmatpush1.msra.mxu0 0.0
        %869 = vmatprep.subr.mxu0 0.0
        %870 = vmatpush1.msra.mxu0 0.0
        %871 = vmatprep.subr.mxu0 0.0
        %872 = vmatpush1.msra.mxu0 0.0
        %873 = vmatprep.subr.mxu0 0.0
        %874 = vmatpush1.msra.mxu0 0.0
        %875 = vmatprep.subr.mxu0 0.0
        %876 = vmatpush1.msra.mxu0 0.0
        %877 = vmatprep.subr.mxu0 0.0
        %878 = vmatpush1.msra.mxu0 0.0
        %879 = vmatprep.subr.mxu0 0.0
        %880 = vmatpush1.msra.mxu0 0.0
        %881 = vmatprep.subr.mxu0 0.0
        %882 = vmatpush1.msra.mxu0 0.0
        %883 = vmatprep.subr.mxu0 0.0
        %884 = vmatpush1.msra.mxu0 0.0
        %885 = vmatprep.subr.mxu0 0.0
        %886 = vmatpush1.msra.mxu0 0.0
        %887 = vmatprep.mubr.f32.mxu0 0.0
        %v888 = vand.u32 %v192, 4294901760
        %889 = vmatmul.mubr.f32.gmra.mrb[0].mxu0 %v888
        %v890 = vpop.f32.mrb[0].mxu0
        %v891 = vadd.f32 %v789, %v890
        %v892 = vpop.f32.mrb[0].mxu0
        %v893 = vadd.f32 %v791, %v892
        %894 = vdwg.mxu0
        %v895 = vand.u32 %v181, 4294901760
        %v896 = vsub.f32 %v181, %v895
        %897 = vmatprep.subr.mxu0 %v896
        %v898 = vand.u32 %v180, 4294901760
        %v899 = vsub.f32 %v180, %v898
        %900 = vmatpush1.msra.mxu0 %v899
        %v901 = vand.u32 %v185, 4294901760
        %v902 = vsub.f32 %v185, %v901
        %903 = vmatprep.subr.mxu0 %v902
        %v904 = vand.u32 %v184, 4294901760
        %v905 = vsub.f32 %v184, %v904
        %906 = vmatpush1.msra.mxu0 %v905
        %v907 = vand.u32 %v189, 4294901760
        %v908 = vsub.f32 %v189, %v907
        %909 = vmatprep.subr.mxu0 %v908
        %v910 = vand.u32 %v188, 4294901760
        %v911 = vsub.f32 %v188, %v910
        %912 = vmatpush1.msra.mxu0 %v911
        %913 = vmatprep.subr.mxu0 0.0
        %914 = vmatpush1.msra.mxu0 0.0
        %915 = vmatprep.subr.mxu0 0.0
        %916 = vmatpush1.msra.mxu0 0.0
        %917 = vmatprep.subr.mxu0 0.0
        %918 = vmatpush1.msra.mxu0 0.0
        %919 = vmatprep.subr.mxu0 0.0
        %920 = vmatpush1.msra.mxu0 0.0
        %921 = vmatprep.subr.mxu0 0.0
        %922 = vmatpush1.msra.mxu0 0.0
        %923 = vmatprep.subr.mxu0 0.0
        %924 = vmatpush1.msra.mxu0 0.0
        %925 = vmatprep.subr.mxu0 0.0
        %926 = vmatpush1.msra.mxu0 0.0
        %927 = vmatprep.subr.mxu0 0.0
        %928 = vmatpush1.msra.mxu0 0.0
        %929 = vmatprep.subr.mxu0 0.0
        %930 = vmatpush1.msra.mxu0 0.0
        %931 = vmatprep.subr.mxu0 0.0
        %932 = vmatpush1.msra.mxu0 0.0
        %933 = vmatprep.subr.mxu0 0.0
        %934 = vmatpush1.msra.mxu0 0.0
        %935 = vmatprep.subr.mxu0 0.0
        %936 = vmatpush1.msra.mxu0 0.0
        %937 = vmatprep.subr.mxu0 0.0
        %938 = vmatpush1.msra.mxu0 0.0
        %939 = vmatprep.subr.mxu0 0.0
        %940 = vmatpush1.msra.mxu0 0.0
        %941 = vmatprep.subr.mxu0 0.0
        %942 = vmatpush1.msra.mxu0 0.0
        %943 = vmatprep.subr.mxu0 0.0
        %944 = vmatpush1.msra.mxu0 0.0
        %945 = vmatprep.subr.mxu0 0.0
        %946 = vmatpush1.msra.mxu0 0.0
        %947 = vmatprep.subr.mxu0 0.0
        %948 = vmatpush1.msra.mxu0 0.0
        %949 = vmatprep.subr.mxu0 0.0
        %950 = vmatpush1.msra.mxu0 0.0
        %951 = vmatprep.subr.mxu0 0.0
        %952 = vmatpush1.msra.mxu0 0.0
        %953 = vmatprep.subr.mxu0 0.0
        %954 = vmatpush1.msra.mxu0 0.0
        %955 = vmatprep.subr.mxu0 0.0
        %956 = vmatpush1.msra.mxu0 0.0
        %957 = vmatprep.subr.mxu0 0.0
        %958 = vmatpush1.msra.mxu0 0.0
        %959 = vmatprep.subr.mxu0 0.0
        %960 = vmatpush1.msra.mxu0 0.0
        %961 = vmatprep.subr.mxu0 0.0
        %962 = vmatpush1.msra.mxu0 0.0
        %963 = vmatprep.subr.mxu0 0.0
        %964 = vmatpush1.msra.mxu0 0.0
        %965 = vmatprep.subr.mxu0 0.0
        %966 = vmatpush1.msra.mxu0 0.0
        %967 = vmatprep.subr.mxu0 0.0
        %968 = vmatpush1.msra.mxu0 0.0
        %969 = vmatprep.subr.mxu0 0.0
        %970 = vmatpush1.msra.mxu0 0.0
        %971 = vmatprep.mubr.f32.mxu0 0.0
        %v972 = vand.u32 %v192, 4294901760
        %v973 = vsub.f32 %v192, %v972
        %974 = vmatmul.mubr.f32.gmra.mrb[0].mxu0 %v973
        %v975 = vpop.f32.mrb[0].mxu0
        %v976 = vadd.f32 %v891, %v975
        %v977 = vpop.f32.mrb[0].mxu0
        %v978 = vadd.f32 %v893, %v977
        %979 = vdwg.mxu0
        %v980 = vand.u32 %v181, 4294901760
        %981 = vmatprep.subr.mxu0 %v980
        %v982 = vand.u32 %v180, 4294901760
        %983 = vmatpush1.msra.mxu0 %v982
        %v984 = vand.u32 %v185, 4294901760
        %985 = vmatprep.subr.mxu0 %v984
        %v986 = vand.u32 %v184, 4294901760
        %987 = vmatpush1.msra.mxu0 %v986
        %v988 = vand.u32 %v189, 4294901760
        %989 = vmatprep.subr.mxu0 %v988
        %v990 = vand.u32 %v188, 4294901760
        %991 = vmatpush1.msra.mxu0 %v990
        %992 = vmatprep.subr.mxu0 0.0
        %993 = vmatpush1.msra.mxu0 0.0
        %994 = vmatprep.subr.mxu0 0.0
        %995 = vmatpush1.msra.mxu0 0.0
        %996 = vmatprep.subr.mxu0 0.0
        %997 = vmatpush1.msra.mxu0 0.0
        %998 = vmatprep.subr.mxu0 0.0
        %999 = vmatpush1.msra.mxu0 0.0
        %1000 = vmatprep.subr.mxu0 0.0
        %1001 = vmatpush1.msra.mxu0 0.0
        %1002 = vmatprep.subr.mxu0 0.0
        %1003 = vmatpush1.msra.mxu0 0.0
        %1004 = vmatprep.subr.mxu0 0.0
        %1005 = vmatpush1.msra.mxu0 0.0
        %1006 = vmatprep.subr.mxu0 0.0
        %1007 = vmatpush1.msra.mxu0 0.0
        %1008 = vmatprep.subr.mxu0 0.0
        %1009 = vmatpush1.msra.mxu0 0.0
        %1010 = vmatprep.subr.mxu0 0.0
        %1011 = vmatpush1.msra.mxu0 0.0
        %1012 = vmatprep.subr.mxu0 0.0
        %1013 = vmatpush1.msra.mxu0 0.0
        %1014 = vmatprep.subr.mxu0 0.0
        %1015 = vmatpush1.msra.mxu0 0.0
        %1016 = vmatprep.subr.mxu0 0.0
        %1017 = vmatpush1.msra.mxu0 0.0
        %1018 = vmatprep.subr.mxu0 0.0
        %1019 = vmatpush1.msra.mxu0 0.0
        %1020 = vmatprep.subr.mxu0 0.0
        %1021 = vmatpush1.msra.mxu0 0.0
        %1022 = vmatprep.subr.mxu0 0.0
        %1023 = vmatpush1.msra.mxu0 0.0
        %1024 = vmatprep.subr.mxu0 0.0
        %1025 = vmatpush1.msra.mxu0 0.0
        %1026 = vmatprep.subr.mxu0 0.0
        %1027 = vmatpush1.msra.mxu0 0.0
        %1028 = vmatprep.subr.mxu0 0.0
        %1029 = vmatpush1.msra.mxu0 0.0
        %1030 = vmatprep.subr.mxu0 0.0
        %1031 = vmatpush1.msra.mxu0 0.0
        %1032 = vmatprep.subr.mxu0 0.0
        %1033 = vmatpush1.msra.mxu0 0.0
        %1034 = vmatprep.subr.mxu0 0.0
        %1035 = vmatpush1.msra.mxu0 0.0
        %1036 = vmatprep.subr.mxu0 0.0
        %1037 = vmatpush1.msra.mxu0 0.0
        %1038 = vmatprep.subr.mxu0 0.0
        %1039 = vmatpush1.msra.mxu0 0.0
        %1040 = vmatprep.subr.mxu0 0.0
        %1041 = vmatpush1.msra.mxu0 0.0
        %1042 = vmatprep.subr.mxu0 0.0
        %1043 = vmatpush1.msra.mxu0 0.0
        %1044 = vmatprep.subr.mxu0 0.0
        %1045 = vmatpush1.msra.mxu0 0.0
        %1046 = vmatprep.subr.mxu0 0.0
        %1047 = vmatpush1.msra.mxu0 0.0
        %1048 = vmatprep.subr.mxu0 0.0
        %1049 = vmatpush1.msra.mxu0 0.0
        %1050 = vmatprep.mubr.f32.mxu0 0.0
        %v1051 = vand.u32 %v192, 4294901760
        %v1052 = vsub.f32 %v192, %v1051
        %v1053 = vand.u32 %v1052, 4294901760
        %1054 = vmatmul.mubr.f32.gmra.mrb[0].mxu0 %v1053
        %v1055 = vpop.f32.mrb[0].mxu0
        %v1056 = vadd.f32 %v976, %v1055
        %v1057 = vpop.f32.mrb[0].mxu0
        %v1058 = vadd.f32 %v978, %v1057
        %1059 = vdwg.mxu0
        %v1060 = vand.u32 %v181, 4294901760
        %v1061 = vsub.f32 %v181, %v1060
        %v1062 = vand.u32 %v1061, 4294901760
        %1063 = vmatprep.subr.mxu0 %v1062
        %v1064 = vand.u32 %v180, 4294901760
        %v1065 = vsub.f32 %v180, %v1064
        %v1066 = vand.u32 %v1065, 4294901760
        %1067 = vmatpush1.msra.mxu0 %v1066
        %v1068 = vand.u32 %v185, 4294901760
        %v1069 = vsub.f32 %v185, %v1068
        %v1070 = vand.u32 %v1069, 4294901760
        %1071 = vmatprep.subr.mxu0 %v1070
        %v1072 = vand.u32 %v184, 4294901760
        %v1073 = vsub.f32 %v184, %v1072
        %v1074 = vand.u32 %v1073, 4294901760
        %1075 = vmatpush1.msra.mxu0 %v1074
        %v1076 = vand.u32 %v189, 4294901760
        %v1077 = vsub.f32 %v189, %v1076
        %v1078 = vand.u32 %v1077, 4294901760
        %1079 = vmatprep.subr.mxu0 %v1078
        %v1080 = vand.u32 %v188, 4294901760
        %v1081 = vsub.f32 %v188, %v1080
        %v1082 = vand.u32 %v1081, 4294901760
        %1083 = vmatpush1.msra.mxu0 %v1082
        %1084 = vmatprep.subr.mxu0 0.0
        %1085 = vmatpush1.msra.mxu0 0.0
        %1086 = vmatprep.subr.mxu0 0.0
        %1087 = vmatpush1.msra.mxu0 0.0
        %1088 = vmatprep.subr.mxu0 0.0
        %1089 = vmatpush1.msra.mxu0 0.0
        %1090 = vmatprep.subr.mxu0 0.0
        %1091 = vmatpush1.msra.mxu0 0.0
        %1092 = vmatprep.subr.mxu0 0.0
        %1093 = vmatpush1.msra.mxu0 0.0
        %1094 = vmatprep.subr.mxu0 0.0
        %1095 = vmatpush1.msra.mxu0 0.0
        %1096 = vmatprep.subr.mxu0 0.0
        %1097 = vmatpush1.msra.mxu0 0.0
        %1098 = vmatprep.subr.mxu0 0.0
        %1099 = vmatpush1.msra.mxu0 0.0
        %1100 = vmatprep.subr.mxu0 0.0
        %1101 = vmatpush1.msra.mxu0 0.0
        %1102 = vmatprep.subr.mxu0 0.0
        %1103 = vmatpush1.msra.mxu0 0.0
        %1104 = vmatprep.subr.mxu0 0.0
        %1105 = vmatpush1.msra.mxu0 0.0
        %1106 = vmatprep.subr.mxu0 0.0
        %1107 = vmatpush1.msra.mxu0 0.0
        %1108 = vmatprep.subr.mxu0 0.0
        %1109 = vmatpush1.msra.mxu0 0.0
        %1110 = vmatprep.subr.mxu0 0.0
        %1111 = vmatpush1.msra.mxu0 0.0
        %1112 = vmatprep.subr.mxu0 0.0
        %1113 = vmatpush1.msra.mxu0 0.0
        %1114 = vmatprep.subr.mxu0 0.0
        %1115 = vmatpush1.msra.mxu0 0.0
        %1116 = vmatprep.subr.mxu0 0.0
        %1117 = vmatpush1.msra.mxu0 0.0
        %1118 = vmatprep.subr.mxu0 0.0
        %1119 = vmatpush1.msra.mxu0 0.0
        %1120 = vmatprep.subr.mxu0 0.0
        %1121 = vmatpush1.msra.mxu0 0.0
        %1122 = vmatprep.subr.mxu0 0.0
        %1123 = vmatpush1.msra.mxu0 0.0
        %1124 = vmatprep.subr.mxu0 0.0
        %1125 = vmatpush1.msra.mxu0 0.0
        %1126 = vmatprep.subr.mxu0 0.0
        %1127 = vmatpush1.msra.mxu0 0.0
        %1128 = vmatprep.subr.mxu0 0.0
        %1129 = vmatpush1.msra.mxu0 0.0
        %1130 = vmatprep.subr.mxu0 0.0
        %1131 = vmatpush1.msra.mxu0 0.0
        %1132 = vmatprep.subr.mxu0 0.0
        %1133 = vmatpush1.msra.mxu0 0.0
        %1134 = vmatprep.subr.mxu0 0.0
        %1135 = vmatpush1.msra.mxu0 0.0
        %1136 = vmatprep.subr.mxu0 0.0
        %1137 = vmatpush1.msra.mxu0 0.0
        %1138 = vmatprep.subr.mxu0 0.0
        %1139 = vmatpush1.msra.mxu0 0.0
        %1140 = vmatprep.subr.mxu0 0.0
        %1141 = vmatpush1.msra.mxu0 0.0
        %1142 = vmatprep.mubr.f32.mxu0 0.0
        %v1143 = vand.u32 %v192, 4294901760
        %1144 = vmatmul.mubr.f32.gmra.mrb[0].mxu0 %v1143
        %v1145 = vpop.f32.mrb[0].mxu0
        %v1146 = vadd.f32 %v1056, %v1145
        %v1147 = vpop.f32.mrb[0].mxu0
        %v1148 = vadd.f32 %v1058, %v1147
        %1149 = vdwg.mxu0
        %v1150 = vand.u32 %v181, 4294901760
        %1151 = vmatprep.subr.mxu0 %v1150
        %v1152 = vand.u32 %v180, 4294901760
        %1153 = vmatpush1.msra.mxu0 %v1152
        %v1154 = vand.u32 %v185, 4294901760
        %1155 = vmatprep.subr.mxu0 %v1154
        %v1156 = vand.u32 %v184, 4294901760
        %1157 = vmatpush1.msra.mxu0 %v1156
        %v1158 = vand.u32 %v189, 4294901760
        %1159 = vmatprep.subr.mxu0 %v1158
        %v1160 = vand.u32 %v188, 4294901760
        %1161 = vmatpush1.msra.mxu0 %v1160
        %1162 = vmatprep.subr.mxu0 0.0
        %1163 = vmatpush1.msra.mxu0 0.0
        %1164 = vmatprep.subr.mxu0 0.0
        %1165 = vmatpush1.msra.mxu0 0.0
        %1166 = vmatprep.subr.mxu0 0.0
        %1167 = vmatpush1.msra.mxu0 0.0
        %1168 = vmatprep.subr.mxu0 0.0
        %1169 = vmatpush1.msra.mxu0 0.0
        %1170 = vmatprep.subr.mxu0 0.0
        %1171 = vmatpush1.msra.mxu0 0.0
        %1172 = vmatprep.subr.mxu0 0.0
        %1173 = vmatpush1.msra.mxu0 0.0
        %1174 = vmatprep.subr.mxu0 0.0
        %1175 = vmatpush1.msra.mxu0 0.0
        %1176 = vmatprep.subr.mxu0 0.0
        %1177 = vmatpush1.msra.mxu0 0.0
        %1178 = vmatprep.subr.mxu0 0.0
        %1179 = vmatpush1.msra.mxu0 0.0
        %1180 = vmatprep.subr.mxu0 0.0
        %1181 = vmatpush1.msra.mxu0 0.0
        %1182 = vmatprep.subr.mxu0 0.0
        %1183 = vmatpush1.msra.mxu0 0.0
        %1184 = vmatprep.subr.mxu0 0.0
        %1185 = vmatpush1.msra.mxu0 0.0
        %1186 = vmatprep.subr.mxu0 0.0
        %1187 = vmatpush1.msra.mxu0 0.0
        %1188 = vmatprep.subr.mxu0 0.0
        %1189 = vmatpush1.msra.mxu0 0.0
        %1190 = vmatprep.subr.mxu0 0.0
        %1191 = vmatpush1.msra.mxu0 0.0
        %1192 = vmatprep.subr.mxu0 0.0
        %1193 = vmatpush1.msra.mxu0 0.0
        %1194 = vmatprep.subr.mxu0 0.0
        %1195 = vmatpush1.msra.mxu0 0.0
        %1196 = vmatprep.subr.mxu0 0.0
        %1197 = vmatpush1.msra.mxu0 0.0
        %1198 = vmatprep.subr.mxu0 0.0
        %1199 = vmatpush1.msra.mxu0 0.0
        %1200 = vmatprep.subr.mxu0 0.0
        %1201 = vmatpush1.msra.mxu0 0.0
        %1202 = vmatprep.subr.mxu0 0.0
        %1203 = vmatpush1.msra.mxu0 0.0
        %1204 = vmatprep.subr.mxu0 0.0
        %1205 = vmatpush1.msra.mxu0 0.0
        %1206 = vmatprep.subr.mxu0 0.0
        %1207 = vmatpush1.msra.mxu0 0.0
        %1208 = vmatprep.subr.mxu0 0.0
        %1209 = vmatpush1.msra.mxu0 0.0
        %1210 = vmatprep.subr.mxu0 0.0
        %1211 = vmatpush1.msra.mxu0 0.0
        %1212 = vmatprep.subr.mxu0 0.0
        %1213 = vmatpush1.msra.mxu0 0.0
        %1214 = vmatprep.subr.mxu0 0.0
        %1215 = vmatpush1.msra.mxu0 0.0
        %1216 = vmatprep.subr.mxu0 0.0
        %1217 = vmatpush1.msra.mxu0 0.0
        %1218 = vmatprep.subr.mxu0 0.0
        %1219 = vmatpush1.msra.mxu0 0.0
        %1220 = vmatprep.mubr.f32.mxu0 0.0
        %v1221 = vand.u32 %v192, 4294901760
        %1222 = vmatmul.mubr.f32.gmra.mrb[0].mxu0 %v1221
        %v1223 = vpop.f32.mrb[0].mxu0
        %v1224 = vadd.f32 %v1146, %v1223
        %v1225 = vpop.f32.mrb[0].mxu0
        %v1226 = vadd.f32 %v1148, %v1225
        %1227 = vdwg.mxu0
        %1228 = vst [vmem:[%s173] sm:$0xff] %v707
        %1229 = vst [vmem:[%s173 + $0x8] sm:$0xff] %v709
        %1230 = vst [vmem:[%s173 + $0x10] sm:$0xff] %v1224
        %1231 = vst [vmem:[%s173 + $0x18] sm:$0xff] %v1226
        %s1232 = sand.u32 %s75, 1
        %s1233 = scalar_lea.sflag [#allocation4], %s1232
        %s1234 = sand.u32 %s75, 1
        %s1235 = smul.addr %s1234, 32
        %s1236 = scalar_lea.vmem [#allocation7], %s1235
        // Predicated region
        $region37: #{tpu_custom_call.1} parent=27 // pred_check
          %p1237 = pneg %p85
        $region38: #{tpu_custom_call.1} parent=27 // pred_check_branch
          %1239 = sbr.rel (%p1237) target = $region40
        $region39: #{tpu_custom_call.1} parent=27 // pred_region
          %s1241 = ssub.s32 512, 512
          %1242 = vsyncadd %s1233, %s1241
          %s1243 = smul.addr %s20, 4
          %s1244 = smul.addr %s1243, 128
          %s1245 = scalar_lea.hbm %s2, %s1244
          %s1247 = sshll.u32 %s1236, 4
          %s1248 = int_to_ptr.vmem [resolvable:$true] %s1247
          %1250 = dma.vmem_to_hbm [thread:$0]  %s1248, 512, %s1245, %s1233
        $region40: #{tpu_custom_call.1} parent=27 // pred_fallthru
          _
      $region28: #{tpu_custom_call.1} parent=5 // pred_fallthru
        _
      %p1251 = scmp.le.s32.totalorder 2, %s15
      // Predicated region
      $region41: #{tpu_custom_call.1} parent=5 // pred_check
        %p1252 = pneg %p1251
      $region42: #{tpu_custom_call.1} parent=5 // pred_check_branch
        %1254 = sbr.rel (%p1252) target = $region44
      $region43: #{tpu_custom_call.1} parent=5 // pred_region
        %s1255 = ssub.s32 %s15, 2
        // Predicated region
        $region45: #{tpu_custom_call.1} parent=43 // pred_check
          %p1256 = pneg %p91
        $region46: #{tpu_custom_call.1} parent=43 // pred_check_branch
          %1258 = sbr.rel (%p1256) target = $region48
        $region47: #{tpu_custom_call.1} parent=43 // pred_region
          %s1259 = sand.u32 %s76, 1
          %s1260 = scalar_lea.sflag [#allocation4], %s1259
          %s1261 = sand.u32 %s76, 1
          %s1262 = smul.addr %s1261, 32
          %s1263 = scalar_lea.vmem [#allocation7], %s1262
          %1264 = dma.done %s1260, 512
        $region48: #{tpu_custom_call.1} parent=43 // pred_fallthru
          _
      $region44: #{tpu_custom_call.1} parent=5 // pred_fallthru
        _
    $region6: #{tpu_custom_call.1} parent=1 // loop_footer
      %s19 = sadd.s32 1, %s15
    $region7: #{tpu_custom_call.1} parent=1 // loop_footer_branch
      %14 = sbr.rel target = $region3
    $region8: #{tpu_custom_call.1} parent=1 // loop_exit
      _
    %1265 = vsyncpa [#allocation3], 1
    %s1266 = scalar_lea.sflag [#allocation3], 1
    %1267 = vsyncpa %s1266, 1
    %1268 = vsyncpa [#allocation6], 1
    %1269 = vsyncpa [#allocation4], 1
    %s1270 = scalar_lea.sflag [#allocation4], 1
    %1271 = vsyncpa %s1270, 1

</llo_original>
